<compile_context>
chip_gen: v7x
topology: tpu7x:2x2x1
jax: 0.10.0
libtpu: 0.0.40
codegen_flags: <defaults>
</compile_context>

<pallas_src>
import functools
import math

import jax
import jax.numpy as jnp
from jax.experimental import pallas as pl
from jax.experimental.pallas import tpu as pltpu


def make_positional_encoding(d_model: int, max_len: int = 5000, dtype=jnp.float32):
    """Deterministic buffer setup (mirrors PyTorch __init__); kept 2-D (max_len, d_model)."""
    position = jnp.arange(max_len, dtype=jnp.float32)[:, None]                       # (max_len, 1)
    div_term = jnp.exp(
        jnp.arange(0, d_model, 2, dtype=jnp.float32) * (-math.log(10000.0) / d_model)
    )                                                                                 # (d_model//2,)
    angles = position * div_term                                                      # (max_len, d_model//2)
    pe = jnp.zeros((max_len, d_model), dtype=jnp.float32)
    pe = pe.at[:, 0::2].set(jnp.sin(angles))
    pe = pe.at[:, 1::2].set(jnp.cos(angles))
    return pe.astype(dtype)                                                           # (max_len, d_model)


def _add_pe_kernel(x_ref, pe_ref, o_ref, *, batch: int, d_model: int):
    """x_ref/o_ref: (TS, batch*d_model) lane-dense tiles.  pe_ref: (TS, d_model)."""
    p = pe_ref[...]  # loaded once per sequence tile
    # Static per-batch slices: broadcast of pe over the batch axis without any reshape /
    # cross-lane relayout.  For d_model % 128 == 0 every slice is a full, aligned vector op.
    for b in range(batch):
        sl = slice(b * d_model, (b + 1) * d_model)
        o_ref[:, sl] = (x_ref[:, sl] + p).astype(o_ref.dtype)


def _choose_seq_tile(S: int, B: int, D: int, itemsize: int,
                     vmem_budget_bytes: int = 12 * 1024 * 1024) -> int:
    """Rows per tile, sized from the full double-buffered working set.

    working set ~= 2*x_tile + 2*out_tile + 2*pe_tile = (4*B*D + 2*D) * TS * itemsize.
    TS is a multiple of the packed sublane count (8 f32 / 16 bf16 / 32 int8) and is capped so
    the sequence grid has at least two steps when S allows it (v7x dual-TensorCore sharding).
    """
    row_mult = 8 * max(1, 4 // itemsize)
    if S <= row_mult:
        return S
    bytes_per_row = (4 * B * D + 2 * D) * itemsize
    ts = vmem_budget_bytes // max(1, bytes_per_row)
    if S >= 2 * row_mult:
        half = -(-((S + 1) // 2) // row_mult) * row_mult  # ceil(S/2) rounded up to row_mult
        ts = min(ts, half)
    ts = max(row_mult, (ts // row_mult) * row_mult)
    return min(ts, S)


def positional_encoding_forward(x: jnp.ndarray, pe: jnp.ndarray, *,
                                alias_input: bool = False) -> jnp.ndarray:
    """x: (seq_len, batch, d_model); pe: (max_len, d_model). Returns x + pe[:seq_len].

    If alias_input=True the output reuses x's buffer (input_output_aliases); the caller MUST
    donate x (e.g. jax.jit(fn, donate_argnums=0)) or XLA inserts a defensive copy of x that
    doubles HBM traffic.  Default (False) writes a fresh output buffer.
    """
    S, B, D = x.shape
    max_len, d_pe = pe.shape
    if d_pe != D:
        raise ValueError(f"pe d_model {d_pe} != x d_model {D}")
    if S > max_len:
        raise ValueError(f"seq_len {S} exceeds max_len {max_len}")
    if pe.dtype != x.dtype:
        pe = pe.astype(x.dtype)  # tiny (max_len, D) cast, negligible vs x traffic

    itemsize = jnp.dtype(x.dtype).itemsize
    TS = _choose_seq_tile(S, B, D, itemsize)
    row_mult = 8 * max(1, 4 // itemsize)

    # pe block second-minor dim must be a multiple of 8 or the full dim.  Only when S is
    # smaller than one packed sublane group (TS == S < row_mult) do we take a tiny slice so
    # the block equals the (sliced) array's full dims.
    pe_arg = pe if TS % row_mult == 0 else pe[:S]

    # Zero-copy lane-dense view of the contiguous (S, B, D) array.
    x2 = x.reshape(S, B * D)

    grid = (pl.cdiv(S, TS),)

    # Raise scoped VMEM only if the working set can't fit the conservative default budget
    # (huge B*D rows); cap at 48 MiB so it stays legal on v7x's 64 MiB physical VMEM.
    working_set = (4 * TS * B * D + 2 * TS * D) * itemsize
    vmem_limit = None
    if working_set > 12 * 1024 * 1024:
        vmem_limit = min(working_set + (4 << 20), 48 * 1024 * 1024)

    cost = pl.CostEstimate(
        flops=S * B * D,
        transcendentals=0,
        bytes_accessed=(2 * S * B * D + S * D) * itemsize,
    )

    out2 = pl.pallas_call(
        functools.partial(_add_pe_kernel, batch=B, d_model=D),
        out_shape=jax.ShapeDtypeStruct((S, B * D), x.dtype),
        grid=grid,
        in_specs=[
            pl.BlockSpec((TS, B * D), lambda i: (i, 0)),  # x slab: contiguous (TS, B*D)
            pl.BlockSpec((TS, D), lambda i: (i, 0)),      # pe tile: (TS, D)
        ],
        out_specs=pl.BlockSpec((TS, B * D), lambda i: (i, 0)),
        input_output_aliases=({0: 0} if alias_input else {}),
        compiler_params=pltpu.CompilerParams(
            dimension_semantics=("parallel",),
            vmem_limit_bytes=vmem_limit,
        ),
        cost_estimate=cost,
    )(x2, pe_arg)

    return out2.reshape(S, B, D)


if __name__ == "__main__":
    d_model = 32
    max_len = 64  # small but > seq_len; same construction as max_len=5000
    pe = make_positional_encoding(d_model, max_len=max_len, dtype=jnp.float32)
    key = jax.random.PRNGKey(0)

    # Test 1: small single-tile case (seq=8, batch=2, hidden=32).
    x1 = jax.random.normal(key, (8, 2, d_model), dtype=jnp.float32)
    ref1 = x1 + pe[:8][:, None, :]
    out1 = jax.block_until_ready(positional_encoding_forward(x1, pe))
    assert out1.shape == x1.shape and out1.dtype == x1.dtype
    assert jnp.allclose(out1, ref1, atol=1e-6, rtol=1e-6)

    # Test 2: multi-tile sequence with a partial trailing block (exercises the pipelined grid).
    x2 = jax.random.normal(jax.random.fold_in(key, 1), (40, 2, d_model), dtype=jnp.float32)
    ref2 = x2 + pe[:40][:, None, :]
    out2 = jax.block_until_ready(positional_encoding_forward(x2, pe))
    assert out2.shape == x2.shape and out2.dtype == x2.dtype
    assert jnp.allclose(out2, ref2, atol=1e-6, rtol=1e-6)

    print("KERNEL_OK")
</pallas_src>

<mosaic_0001>
module attributes {stable_mosaic.version = 11 : i64} {
  func.func @_add_pe_kernel(%arg0: i32, %arg1: memref<8x64xf32, #tpu.memory_space<vmem>>, %arg2: memref<8x32xf32, #tpu.memory_space<vmem>>, %arg3: memref<8x64xf32, #tpu.memory_space<vmem>>) attributes {dimension_semantics = [#tpu.dimension_semantics<parallel>], iteration_bounds = array<i64: 1>, scalar_prefetch = 0 : i64, scratch_operands = 0 : i64, tpu.core_type = #tpu.core_type<tc>, window_params = [{transform_indices = @transform_0, window_bounds = array<i64: 8, 64>}, {transform_indices = @transform_1, window_bounds = array<i64: 8, 32>}, {transform_indices = @transform_2, window_bounds = array<i64: 8, 64>}]} {
    %c0 = arith.constant 0 : index
    %c0_0 = arith.constant 0 : index
    %0 = vector.load %arg2[%c0, %c0_0] : memref<8x32xf32, #tpu.memory_space<vmem>>, vector<8x32xf32>
    %c0_1 = arith.constant 0 : index
    %c0_2 = arith.constant 0 : index
    %1 = vector.load %arg1[%c0_1, %c0_2] : memref<8x64xf32, #tpu.memory_space<vmem>>, vector<8x32xf32>
    %2 = arith.addf %1, %0 : vector<8x32xf32>
    %c0_3 = arith.constant 0 : index
    %c0_4 = arith.constant 0 : index
    %3 = vector.load %arg3[%c0_3, %c0_4] : memref<8x64xf32, #tpu.memory_space<vmem>>, vector<8x32xf32>
    tpu.vector_store %arg3[%c0_3, %c0_4], %2 {strides = array<i32>} : memref<8x64xf32, #tpu.memory_space<vmem>>, vector<8x32xf32>,
    %c0_5 = arith.constant 0 : index
    %c32 = arith.constant 32 : index
    %4 = vector.load %arg1[%c0_5, %c32] : memref<8x64xf32, #tpu.memory_space<vmem>>, vector<8x32xf32>
    %5 = arith.addf %4, %0 : vector<8x32xf32>
    %c0_6 = arith.constant 0 : index
    %c32_7 = arith.constant 32 : index
    %6 = vector.load %arg3[%c0_6, %c32_7] : memref<8x64xf32, #tpu.memory_space<vmem>>, vector<8x32xf32>
    tpu.vector_store %arg3[%c0_6, %c32_7], %5 {strides = array<i32>} : memref<8x64xf32, #tpu.memory_space<vmem>>, vector<8x32xf32>,
    return
  }
  func.func @transform_0(%arg0: i32) -> (i32, i32) {
    %c0_i32 = arith.constant 0 : i32
    %c0_i32_0 = arith.constant 0 : i32
    return %arg0, %c0_i32 : i32, i32
  }
  func.func @transform_1(%arg0: i32) -> (i32, i32) {
    %c0_i32 = arith.constant 0 : i32
    %c0_i32_0 = arith.constant 0 : i32
    return %arg0, %c0_i32 : i32, i32
  }
  func.func @transform_2(%arg0: i32) -> (i32, i32) {
    %c0_i32 = arith.constant 0 : i32
    %c0_i32_0 = arith.constant 0 : i32
    return %arg0, %c0_i32 : i32, i32
  }
}

</mosaic_0001>

<llo_original>
// kernel: tpu_custom_call.1
$region0: #{tpu_custom_call.1}
  #allocation0 [shape = 'u32[]', space=smem, size = 0x4, offset = 0x4, fixed_abs, tag = 'smem constant byte address 0x4 - core index']
  #allocation1 [shape = 'u32[144,128]{1,0:T(1,128)}', space=vmem, size = 0x12000, scoped, tag = 'internal scratch']
  %s0 = inlined_call_operand.vmem [shape: f32[8,64], index: 0, kind: input, shape index: {}]
  %s1 = inlined_call_operand.vmem [shape: f32[64,32], index: 1, kind: input, shape index: {}]
  %s2 = inlined_call_operand.hbm [shape: f32[8,64], index: 2, kind: output, shape index: {}]
  %s3 = sld [smem:[#allocation0]]
  $region18: #{tpu_custom_call.1} parent=0
    _
  %s5 = ssub.s32 1, %s3
  %s6 = scalar_select 0, %s5, %s3
  $region1: #{tpu_custom_call.1} parent=0
    #allocation2 [shape = 'u8[4096]{0}', space=vmem, size = 0x1000, scoped, tag = 'output window, operand 0, single buffered']
    #allocation3 [shape = 's32[1]{0}', space=sflag, size = 0x4, scoped, tag = 'scoped memory for tpu_custom_call.1']
    %7 = vsyncpa [#allocation3], 0
    // Predicated region
    $region2: #{tpu_custom_call.1} parent=1 // pred_check
      _
    $region3: #{tpu_custom_call.1} parent=1 // pred_check_branch
      %9 = sbr.rel (0) target = $region5
    $region4: #{tpu_custom_call.1} parent=1 // pred_region
      _
    $region5: #{tpu_custom_call.1} parent=1 // pred_fallthru
      _
    // Predicated region
    $region6: #{tpu_custom_call.1} parent=1 // pred_check
      _
    $region7: #{tpu_custom_call.1} parent=1 // pred_check_branch
      %11 = sbr.rel (0) target = $region9
    $region8: #{tpu_custom_call.1} parent=1 // pred_region
      _
    $region9: #{tpu_custom_call.1} parent=1 // pred_fallthru
      _
    %v12 = vld [vmem:[%s1] sm:$0xff]
    %v13 = vld [vmem:[%s0] sm:$0xff]
    %v14 = vadd.f32 %v13, %v12
    %vm15 = vcmask 261120
    %16 = vst.msk [vmem:[#allocation2] sm:$0xff] %vm15, %v14
    %v17 = vld [vmem:[%s0] sm:$0xff]
    %19 = vrot.lane.b32.xlu0 %v12, 32
    %v20 = vpop.permute.xlu0 %19
    %v22 = vadd.f32 %v17, %v20
    %vm23 = vcmask 523520
    %24 = vst.msk [vmem:[#allocation2] sm:$0xff] %vm23, %v22
    // Predicated region
    $region10: #{tpu_custom_call.1} parent=1 // pred_check
      _
    $region11: #{tpu_custom_call.1} parent=1 // pred_check_branch
      %26 = sbr.rel (0) target = $region13
    $region12: #{tpu_custom_call.1} parent=1 // pred_region
      %s28 = ssub.s32 128, 128
      %29 = vsyncadd [#allocation3], %s28
      %s31 = sshll.u32 [#allocation2], 4
      %s32 = int_to_ptr.vmem [resolvable:$true] %s31
      %34 = dma.vmem_to_hbm [thread:$0]  %s32, 128, %s2, [#allocation3]
    $region13: #{tpu_custom_call.1} parent=1 // pred_fallthru
      _
    // Predicated region
    $region14: #{tpu_custom_call.1} parent=1 // pred_check
      _
    $region15: #{tpu_custom_call.1} parent=1 // pred_check_branch
      %36 = sbr.rel (0) target = $region17
    $region16: #{tpu_custom_call.1} parent=1 // pred_region
      %37 = dma.done [#allocation3], 128
    $region17: #{tpu_custom_call.1} parent=1 // pred_fallthru
      _
    %38 = vsyncpa [#allocation3], 1

</llo_original>
